<compile_context>
chip_gen: v7x
topology: tpu7x:2x2x1
jax: 0.10.0
libtpu: 0.0.40
codegen_flags: <defaults>
</compile_context>

<pallas_src>
import math

import jax
import jax.numpy as jnp
from jax.experimental import pallas as pl
from jax.experimental.pallas import tpu as pltpu

LANE = 128  # TPU lane width


def _round_up(n, m):
    return ((n + m - 1) // m) * m


def dqn_kernel(x_ref, w1_ref, b1_ref, w2_ref, b2_ref,
               w3_ref, b3_ref, w4_ref, b4_ref, o_ref):
    """One batch tile of the fused 4-layer MLP.

    Matmul operands are cast to the weight dtype (bf16) for the MXU; accumulation
    is f32 via preferred_element_type; bias add / ReLU stay in f32 (VPU-safe on
    v5e). Only the first `output_size` lanes of the final layer are real, so only
    those are stored (minimizes the dominant HBM writeback)."""
    mxu_dtype = w1_ref.dtype
    out_cols = o_ref.shape[1]          # = output_size (static)

    x = x_ref[...].astype(mxu_dtype)

    h = jnp.dot(x, w1_ref[...], preferred_element_type=jnp.float32) + b1_ref[...]
    h = jnp.maximum(h, 0.0)

    h = jnp.dot(h.astype(mxu_dtype), w2_ref[...],
                preferred_element_type=jnp.float32) + b2_ref[...]
    h = jnp.maximum(h, 0.0)

    h = jnp.dot(h.astype(mxu_dtype), w3_ref[...],
                preferred_element_type=jnp.float32) + b3_ref[...]
    h = jnp.maximum(h, 0.0)

    y = jnp.dot(h.astype(mxu_dtype), w4_ref[...],
                preferred_element_type=jnp.float32) + b4_ref[...]
    # Static lane slice of the padded (TB, 128) result -> (TB, output_size) store.
    o_ref[...] = y[:, :out_cols].astype(o_ref.dtype)


def prepare_params(params, mxu_dtype=jnp.bfloat16):
    """Zero-pad hidden/output feature dims to multiples of 128 (lane-dense) and cast
    weights to the MXU dtype. Padded hidden units see zero weights + zero bias, so
    they stay exactly 0 through ReLU and contribute nothing downstream; padded output
    columns are never stored (the kernel slices them off). Biases stay f32."""
    w1, b1, w2, b2, w3, b3, w4, b4 = params
    F, H = w1.shape
    O = w4.shape[1]
    Hp = _round_up(H, LANE)
    Op = _round_up(O, LANE)

    def pad2(a, r, c):
        return jnp.pad(a, ((0, r - a.shape[0]), (0, c - a.shape[1])))

    return (
        pad2(w1, F, Hp).astype(mxu_dtype), pad2(b1, 1, Hp).astype(jnp.float32),
        pad2(w2, Hp, Hp).astype(mxu_dtype), pad2(b2, 1, Hp).astype(jnp.float32),
        pad2(w3, Hp, Hp).astype(mxu_dtype), pad2(b3, 1, Hp).astype(jnp.float32),
        pad2(w4, Hp, Op).astype(mxu_dtype), pad2(b4, 1, Op).astype(jnp.float32),
    )


def _batch_tiling(B, tb):
    """Pick the batch tile: ~tb rows per tile (rounded to the f32 sublane of 8) and,
    when more than one tile is needed, an even tile count so v7x's two TensorCores
    both get work under dimension_semantics=("parallel",)."""
    n_tiles = max(1, pl.cdiv(B, tb))
    if n_tiles > 1 and n_tiles % 2 == 1:
        n_tiles += 1
    TB = _round_up(pl.cdiv(B, n_tiles), 8)
    return TB, pl.cdiv(B, TB)


def dqn_forward(x, padded_params, output_size, tb=512, out_dtype=jnp.float32):
    """Fused DQN forward. x: [B, F] f32. Returns [B, output_size] in out_dtype
    (f32 by default; bf16 halves the dominant HBM writeback if acceptable)."""
    w1, b1, w2, b2, w3, b3, w4, b4 = padded_params
    B, F = x.shape
    Hp = w1.shape[1]
    Op = w4.shape[1]

    TB, n_tiles = _batch_tiling(B, tb)
    grid = (n_tiles,)
    resident = lambda i: (0, 0)   # weights/biases stay pinned in VMEM across the grid

    # Advisory cost so XLA overlaps neighbors with the custom call.
    flops = 2 * B * Hp * (F + Hp + Hp + Op)
    weight_bytes = sum(int(a.size) * a.dtype.itemsize for a in padded_params)
    bytes_accessed = (B * F * x.dtype.itemsize
                      + B * output_size * jnp.dtype(out_dtype).itemsize
                      + weight_bytes)
    cost = pl.CostEstimate(flops=flops, transcendentals=0,
                           bytes_accessed=bytes_accessed)

    # TODO(synk): if the upstream producer can emit x already lane-padded/bf16, the
    # x DMA becomes dense for free; do NOT pad/cast here (extra HBM pass).
    out = pl.pallas_call(
        dqn_kernel,
        out_shape=jax.ShapeDtypeStruct((B, output_size), out_dtype),
        grid=grid,
        in_specs=[
            pl.BlockSpec((TB, F), lambda i: (i, 0)),   # x: batch-tiled, pipelined
            pl.BlockSpec((F, Hp), resident),           # w1
            pl.BlockSpec((1, Hp), resident),           # b1
            pl.BlockSpec((Hp, Hp), resident),          # w2
            pl.BlockSpec((1, Hp), resident),           # b2
            pl.BlockSpec((Hp, Hp), resident),          # w3
            pl.BlockSpec((1, Hp), resident),           # b3
            pl.BlockSpec((Hp, Op), resident),          # w4
            pl.BlockSpec((1, Op), resident),           # b4
        ],
        # Only the real output columns are ever written back to HBM.
        out_specs=pl.BlockSpec((TB, output_size), lambda i: (i, 0)),
        compiler_params=pltpu.CompilerParams(
            dimension_semantics=("parallel",),   # shard batch tiles across TCs (v7x)
        ),
        cost_estimate=cost,
    )(x, w1, b1, w2, b2, w3, b3, w4, b4)

    return out


def init_params(key, input_shape, hidden_size, output_size):
    """Mirrors the PyTorch module's init_weight(): first three Linear weights
    ~ N(0, sqrt(2/fan_in)) with zero bias; output layer keeps PyTorch's default
    Linear init (uniform in +-1/sqrt(fan_in))."""
    k1, k2, k3, k4, k5 = jax.random.split(key, 5)
    w1 = jax.random.normal(k1, (input_shape, hidden_size), jnp.float32) * math.sqrt(2.0 / input_shape)
    b1 = jnp.zeros((1, hidden_size), jnp.float32)
    w2 = jax.random.normal(k2, (hidden_size, hidden_size), jnp.float32) * math.sqrt(2.0 / hidden_size)
    b2 = jnp.zeros((1, hidden_size), jnp.float32)
    w3 = jax.random.normal(k3, (hidden_size, hidden_size), jnp.float32) * math.sqrt(2.0 / hidden_size)
    b3 = jnp.zeros((1, hidden_size), jnp.float32)
    bound = 1.0 / math.sqrt(hidden_size)
    w4 = jax.random.uniform(k4, (hidden_size, output_size), jnp.float32, -bound, bound)
    b4 = jax.random.uniform(k5, (1, output_size), jnp.float32, -bound, bound)
    return (w1, b1, w2, b2, w3, b3, w4, b4)


def reference_forward(x, params):
    """Pure f32 reference (PyTorch semantics)."""
    w1, b1, w2, b2, w3, b3, w4, b4 = params
    h = jnp.maximum(x @ w1 + b1, 0.0)
    h = jnp.maximum(h @ w2 + b2, 0.0)
    h = jnp.maximum(h @ w3 + b3, 0.0)
    return h @ w4 + b4


def reference_forward_mxu(x, params):
    """Reference matching the kernel's precision: bf16 matmul operands, f32 accum."""
    w1, b1, w2, b2, w3, b3, w4, b4 = params
    bf = jnp.bfloat16

    def mm(a, w):
        return jnp.dot(a.astype(bf), w.astype(bf), preferred_element_type=jnp.float32)

    h = jnp.maximum(mm(x, w1) + b1, 0.0)
    h = jnp.maximum(mm(h, w2) + b2, 0.0)
    h = jnp.maximum(mm(h, w3) + b3, 0.0)
    return mm(h, w4) + b4


if __name__ == "__main__":
    batch = 8
    input_shape = 16
    hidden_size = 32
    output_size = 4

    key = jax.random.PRNGKey(0)
    kx, kp, kx2 = jax.random.split(key, 3)
    x = jax.random.normal(kx, (batch, input_shape), jnp.float32)
    params = init_params(kp, input_shape, hidden_size, output_size)
    padded = prepare_params(params)

    # Small-batch case (single grid point, narrow (B, 4) output, no slicing).
    out = jax.block_until_ready(dqn_forward(x, padded, output_size))
    assert out.shape == (batch, output_size)
    assert out.dtype == jnp.float32
    assert jnp.allclose(out, reference_forward_mxu(x, params), atol=1e-3, rtol=1e-3), \
        "mismatch vs bf16-matched reference"
    assert jnp.allclose(out, reference_forward(x, params), atol=5e-2, rtol=5e-2), \
        "mismatch vs f32 reference"

    # Larger batch: even tile count (4 tiles of 304 rows) for v7x megacore and a
    # partial last block handled by Pallas (no wrapper pad, no post-kernel slice).
    x_big = jax.random.normal(kx2, (1200, input_shape), jnp.float32)
    out_big = jax.block_until_ready(dqn_forward(x_big, padded, output_size))
    assert out_big.shape == (1200, output_size)
    assert jnp.allclose(out_big, reference_forward_mxu(x_big, params), atol=1e-3, rtol=1e-3)
    assert jnp.allclose(out_big, reference_forward(x_big, params), atol=5e-2, rtol=5e-2)

    # Optional bf16 output store (halves the already-small writeback) — loose check.
    out_bf16 = jax.block_until_ready(
        dqn_forward(x_big, padded, output_size, out_dtype=jnp.bfloat16))
    assert out_bf16.dtype == jnp.bfloat16
    assert jnp.allclose(out_bf16.astype(jnp.float32),
                        reference_forward_mxu(x_big, params), atol=3e-2, rtol=3e-2)

    print("KERNEL_OK")
</pallas_src>

<mosaic_0001>
module attributes {stable_mosaic.version = 11 : i64} {
  func.func @dqn_kernel(%arg0: i32, %arg1: memref<8x16xf32, #tpu.memory_space<vmem>>, %arg2: memref<16x128xbf16, #tpu.memory_space<vmem>>, %arg3: memref<1x128xf32, #tpu.memory_space<vmem>>, %arg4: memref<128x128xbf16, #tpu.memory_space<vmem>>, %arg5: memref<1x128xf32, #tpu.memory_space<vmem>>, %arg6: memref<128x128xbf16, #tpu.memory_space<vmem>>, %arg7: memref<1x128xf32, #tpu.memory_space<vmem>>, %arg8: memref<128x128xbf16, #tpu.memory_space<vmem>>, %arg9: memref<1x128xf32, #tpu.memory_space<vmem>>, %arg10: memref<8x4xf32, #tpu.memory_space<vmem>>) attributes {dimension_semantics = [#tpu.dimension_semantics<parallel>], iteration_bounds = array<i64: 1>, scalar_prefetch = 0 : i64, scratch_operands = 0 : i64, tpu.core_type = #tpu.core_type<tc>, window_params = [{transform_indices = @transform_0, window_bounds = array<i64: 8, 16>}, {pipeline_mode = #tpu.pipeline_mode<synchronous>, transform_indices = @transform_1, window_bounds = array<i64: 16, 128>}, {pipeline_mode = #tpu.pipeline_mode<synchronous>, transform_indices = @transform_2, window_bounds = array<i64: 1, 128>}, {pipeline_mode = #tpu.pipeline_mode<synchronous>, transform_indices = @transform_3, window_bounds = array<i64: 128, 128>}, {pipeline_mode = #tpu.pipeline_mode<synchronous>, transform_indices = @transform_4, window_bounds = array<i64: 1, 128>}, {pipeline_mode = #tpu.pipeline_mode<synchronous>, transform_indices = @transform_5, window_bounds = array<i64: 128, 128>}, {pipeline_mode = #tpu.pipeline_mode<synchronous>, transform_indices = @transform_6, window_bounds = array<i64: 1, 128>}, {pipeline_mode = #tpu.pipeline_mode<synchronous>, transform_indices = @transform_7, window_bounds = array<i64: 128, 128>}, {pipeline_mode = #tpu.pipeline_mode<synchronous>, transform_indices = @transform_8, window_bounds = array<i64: 1, 128>}, {transform_indices = @transform_9, window_bounds = array<i64: 8, 4>}]} {
    %c0 = arith.constant 0 : index
    %c0_0 = arith.constant 0 : index
    %0 = vector.load %arg1[%c0, %c0_0] : memref<8x16xf32, #tpu.memory_space<vmem>>, vector<8x16xf32>
    %1 = arith.truncf %0 : vector<8x16xf32> to vector<8x16xbf16>
    %c0_1 = arith.constant 0 : index
    %c0_2 = arith.constant 0 : index
    %2 = vector.load %arg2[%c0_1, %c0_2] : memref<16x128xbf16, #tpu.memory_space<vmem>>, vector<16x128xbf16>
    %cst = arith.constant dense<0.000000e+00> : vector<8x128xf32>
    %3 = tpu.matmul %1, %2, %cst {dimension_numbers = #tpu.dot_dimension_numbers<[1], [0], [0], [1], [0, 0, 1, 1], [], []>} : vector<8x16xbf16>, vector<16x128xbf16>, vector<8x128xf32> -> vector<8x128xf32>
    %c0_3 = arith.constant 0 : index
    %c0_4 = arith.constant 0 : index
    %4 = vector.load %arg3[%c0_3, %c0_4] : memref<1x128xf32, #tpu.memory_space<vmem>>, vector<1x128xf32>
    %5 = vector.broadcast %4 : vector<1x128xf32> to vector<8x128xf32>
    %6 = arith.addf %3, %5 : vector<8x128xf32>
    %cst_5 = arith.constant 0.000000e+00 : f32
    %7 = vector.broadcast %cst_5 : f32 to vector<8x128xf32>
    %8 = arith.maximumf %6, %7 : vector<8x128xf32>
    %9 = arith.truncf %8 : vector<8x128xf32> to vector<8x128xbf16>
    %c0_6 = arith.constant 0 : index
    %c0_7 = arith.constant 0 : index
    %10 = vector.load %arg4[%c0_6, %c0_7] : memref<128x128xbf16, #tpu.memory_space<vmem>>, vector<128x128xbf16>
    %cst_8 = arith.constant dense<0.000000e+00> : vector<8x128xf32>
    %11 = tpu.matmul %9, %10, %cst_8 {dimension_numbers = #tpu.dot_dimension_numbers<[1], [0], [0], [1], [0, 0, 1, 1], [], []>} : vector<8x128xbf16>, vector<128x128xbf16>, vector<8x128xf32> -> vector<8x128xf32>
    %c0_9 = arith.constant 0 : index
    %c0_10 = arith.constant 0 : index
    %12 = vector.load %arg5[%c0_9, %c0_10] : memref<1x128xf32, #tpu.memory_space<vmem>>, vector<1x128xf32>
    %13 = vector.broadcast %12 : vector<1x128xf32> to vector<8x128xf32>
    %14 = arith.addf %11, %13 : vector<8x128xf32>
    %cst_11 = arith.constant 0.000000e+00 : f32
    %15 = vector.broadcast %cst_11 : f32 to vector<8x128xf32>
    %16 = arith.maximumf %14, %15 : vector<8x128xf32>
    %17 = arith.truncf %16 : vector<8x128xf32> to vector<8x128xbf16>
    %c0_12 = arith.constant 0 : index
    %c0_13 = arith.constant 0 : index
    %18 = vector.load %arg6[%c0_12, %c0_13] : memref<128x128xbf16, #tpu.memory_space<vmem>>, vector<128x128xbf16>
    %cst_14 = arith.constant dense<0.000000e+00> : vector<8x128xf32>
    %19 = tpu.matmul %17, %18, %cst_14 {dimension_numbers = #tpu.dot_dimension_numbers<[1], [0], [0], [1], [0, 0, 1, 1], [], []>} : vector<8x128xbf16>, vector<128x128xbf16>, vector<8x128xf32> -> vector<8x128xf32>
    %c0_15 = arith.constant 0 : index
    %c0_16 = arith.constant 0 : index
    %20 = vector.load %arg7[%c0_15, %c0_16] : memref<1x128xf32, #tpu.memory_space<vmem>>, vector<1x128xf32>
    %21 = vector.broadcast %20 : vector<1x128xf32> to vector<8x128xf32>
    %22 = arith.addf %19, %21 : vector<8x128xf32>
    %cst_17 = arith.constant 0.000000e+00 : f32
    %23 = vector.broadcast %cst_17 : f32 to vector<8x128xf32>
    %24 = arith.maximumf %22, %23 : vector<8x128xf32>
    %25 = arith.truncf %24 : vector<8x128xf32> to vector<8x128xbf16>
    %c0_18 = arith.constant 0 : index
    %c0_19 = arith.constant 0 : index
    %26 = vector.load %arg8[%c0_18, %c0_19] : memref<128x128xbf16, #tpu.memory_space<vmem>>, vector<128x128xbf16>
    %cst_20 = arith.constant dense<0.000000e+00> : vector<8x128xf32>
    %27 = tpu.matmul %25, %26, %cst_20 {dimension_numbers = #tpu.dot_dimension_numbers<[1], [0], [0], [1], [0, 0, 1, 1], [], []>} : vector<8x128xbf16>, vector<128x128xbf16>, vector<8x128xf32> -> vector<8x128xf32>
    %c0_21 = arith.constant 0 : index
    %c0_22 = arith.constant 0 : index
    %28 = vector.load %arg9[%c0_21, %c0_22] : memref<1x128xf32, #tpu.memory_space<vmem>>, vector<1x128xf32>
    %29 = vector.broadcast %28 : vector<1x128xf32> to vector<8x128xf32>
    %30 = arith.addf %27, %29 : vector<8x128xf32>
    %31 = vector.extract_strided_slice %30 {offsets = [0, 0], sizes = [8, 4], strides = [1, 1]} : vector<8x128xf32> to vector<8x4xf32>
    %c0_23 = arith.constant 0 : index
    %c0_24 = arith.constant 0 : index
    %32 = vector.load %arg10[%c0_23, %c0_24] : memref<8x4xf32, #tpu.memory_space<vmem>>, vector<8x4xf32>
    tpu.vector_store %arg10[%c0_23, %c0_24], %31 {strides = array<i32>} : memref<8x4xf32, #tpu.memory_space<vmem>>, vector<8x4xf32>,
    return
  }
  func.func @transform_0(%arg0: i32) -> (i32, i32) {
    %c0_i32 = arith.constant 0 : i32
    %c0_i32_0 = arith.constant 0 : i32
    return %arg0, %c0_i32 : i32, i32
  }
  func.func @transform_1(%arg0: i32) -> (i32, i32) {
    %c0_i32 = arith.constant 0 : i32
    %c0_i32_0 = arith.constant 0 : i32
    %c0_i32_1 = arith.constant 0 : i32
    return %c0_i32, %c0_i32_0 : i32, i32
  }
  func.func @transform_2(%arg0: i32) -> (i32, i32) {
    %c0_i32 = arith.constant 0 : i32
    %c0_i32_0 = arith.constant 0 : i32
    %c0_i32_1 = arith.constant 0 : i32
    return %c0_i32, %c0_i32_0 : i32, i32
  }
  func.func @transform_3(%arg0: i32) -> (i32, i32) {
    %c0_i32 = arith.constant 0 : i32
    %c0_i32_0 = arith.constant 0 : i32
    %c0_i32_1 = arith.constant 0 : i32
    return %c0_i32, %c0_i32_0 : i32, i32
  }
  func.func @transform_4(%arg0: i32) -> (i32, i32) {
    %c0_i32 = arith.constant 0 : i32
    %c0_i32_0 = arith.constant 0 : i32
    %c0_i32_1 = arith.constant 0 : i32
    return %c0_i32, %c0_i32_0 : i32, i32
  }
  func.func @transform_5(%arg0: i32) -> (i32, i32) {
    %c0_i32 = arith.constant 0 : i32
    %c0_i32_0 = arith.constant 0 : i32
    %c0_i32_1 = arith.constant 0 : i32
    return %c0_i32, %c0_i32_0 : i32, i32
  }
  func.func @transform_6(%arg0: i32) -> (i32, i32) {
    %c0_i32 = arith.constant 0 : i32
    %c0_i32_0 = arith.constant 0 : i32
    %c0_i32_1 = arith.constant 0 : i32
    return %c0_i32, %c0_i32_0 : i32, i32
  }
  func.func @transform_7(%arg0: i32) -> (i32, i32) {
    %c0_i32 = arith.constant 0 : i32
    %c0_i32_0 = arith.constant 0 : i32
    %c0_i32_1 = arith.constant 0 : i32
    return %c0_i32, %c0_i32_0 : i32, i32
  }
  func.func @transform_8(%arg0: i32) -> (i32, i32) {
    %c0_i32 = arith.constant 0 : i32
    %c0_i32_0 = arith.constant 0 : i32
    %c0_i32_1 = arith.constant 0 : i32
    return %c0_i32, %c0_i32_0 : i32, i32
  }
  func.func @transform_9(%arg0: i32) -> (i32, i32) {
    %c0_i32 = arith.constant 0 : i32
    %c0_i32_0 = arith.constant 0 : i32
    return %arg0, %c0_i32 : i32, i32
  }
}

</mosaic_0001>

<llo_original>
// kernel: tpu_custom_call.1
$region0: #{tpu_custom_call.1}
  #allocation0 [shape = 'u32[]', space=smem, size = 0x4, offset = 0x4, fixed_abs, tag = 'smem constant byte address 0x4 - core index']
  #allocation1 [shape = 'u32[144,128]{1,0:T(1,128)}', space=vmem, size = 0x12000, scoped, tag = 'internal scratch']
  %s0 = inlined_call_operand.hbm [shape: f32[8,16], index: 0, kind: input, shape index: {}]
  %s1 = inlined_call_operand.hbm [shape: bf16[16,128], index: 1, kind: input, shape index: {}]
  %s2 = inlined_call_operand.vmem [shape: f32[1,128], index: 2, kind: input, shape index: {}]
  %s3 = inlined_call_operand.hbm [shape: bf16[128,128], index: 3, kind: input, shape index: {}]
  %s4 = inlined_call_operand.vmem [shape: f32[1,128], index: 4, kind: input, shape index: {}]
  %s5 = inlined_call_operand.hbm [shape: bf16[128,128], index: 5, kind: input, shape index: {}]
  %s6 = inlined_call_operand.vmem [shape: f32[1,128], index: 6, kind: input, shape index: {}]
  %s7 = inlined_call_operand.hbm [shape: bf16[128,128], index: 7, kind: input, shape index: {}]
  %s8 = inlined_call_operand.vmem [shape: f32[1,128], index: 8, kind: input, shape index: {}]
  %s9 = inlined_call_operand.vmem [shape: f32[8,4], index: 9, kind: output, shape index: {}]
  %s10 = sld [smem:[#allocation0]]
  $region66: #{tpu_custom_call.1} parent=0
    _
  %s12 = ssub.s32 1, %s10
  %s13 = scalar_select 0, %s12, %s10
  $region1: #{tpu_custom_call.1} parent=0
    #allocation2 [shape = 'u8[4096]{0}', space=vmem, size = 0x1000, scoped, tag = 'input window, operand 0, single buffered']
    #allocation3 [shape = 's32[1]{0}', space=sflag, size = 0x4, scoped, tag = 'scoped memory for tpu_custom_call.1']
    #allocation4 [shape = 'u8[4096]{0}', space=vmem, size = 0x1000, scoped, tag = 'input window, operand 1, single buffered']
    #allocation5 [shape = 's32[1]{0}', space=sflag, size = 0x4, scoped, tag = 'scoped memory for tpu_custom_call.1']
    #allocation6 [shape = 'u8[32768]{0}', space=vmem, size = 0x8000, scoped, tag = 'input window, operand 3, single buffered']
    #allocation7 [shape = 'u8[32768]{0}', space=vmem, size = 0x8000, scoped, tag = 'input window, operand 5, single buffered']
    #allocation8 [shape = 's32[1]{0}', space=sflag, size = 0x4, scoped, tag = 'scoped memory for tpu_custom_call.1']
    #allocation9 [shape = 'u8[32768]{0}', space=vmem, size = 0x8000, scoped, tag = 'input window, operand 7, single buffered']
    %14 = vsyncpa [#allocation3], 0
    %15 = vsyncpa [#allocation5], 0
    %16 = vsyncpa [#allocation8], 0
    // Predicated region
    $region2: #{tpu_custom_call.1} parent=1 // pred_check
      _
    $region3: #{tpu_custom_call.1} parent=1 // pred_check_branch
      %18 = sbr.rel (0) target = $region5
    $region4: #{tpu_custom_call.1} parent=1 // pred_region
      %s20 = ssub.s32 128, 128
      %21 = vsyncadd [#allocation3], %s20
      %s23 = sshll.u32 [#allocation2], 4
      %s24 = int_to_ptr.vmem [resolvable:$true] %s23
      %26 = dma.hbm_to_vmem [thread:$0]  %s0, 128, %s24, [#allocation3]
    $region5: #{tpu_custom_call.1} parent=1 // pred_fallthru
      _
    // Predicated region
    $region6: #{tpu_custom_call.1} parent=1 // pred_check
      _
    $region7: #{tpu_custom_call.1} parent=1 // pred_check_branch
      %28 = sbr.rel (0) target = $region9
    $region8: #{tpu_custom_call.1} parent=1 // pred_region
      %s30 = ssub.s32 128, 128
      %31 = vsyncadd [#allocation5], %s30
      %s32 = sshll.u32 [#allocation4], 4
      %s33 = int_to_ptr.vmem [resolvable:$true] %s32
      %38 = dma.hbm_to_vmem [thread:$0]  %s1, 128, %s33, [#allocation5], 64, 64, 4
    $region9: #{tpu_custom_call.1} parent=1 // pred_fallthru
      _
    // Predicated region
    $region10: #{tpu_custom_call.1} parent=1 // pred_check
      _
    $region11: #{tpu_custom_call.1} parent=1 // pred_check_branch
      %40 = sbr.rel (0) target = $region13
    $region12: #{tpu_custom_call.1} parent=1 // pred_region
      _
    $region13: #{tpu_custom_call.1} parent=1 // pred_fallthru
      _
    // Predicated region
    $region14: #{tpu_custom_call.1} parent=1 // pred_check
      _
    $region15: #{tpu_custom_call.1} parent=1 // pred_check_branch
      %42 = sbr.rel (0) target = $region17
    $region16: #{tpu_custom_call.1} parent=1 // pred_region
      %s44 = ssub.s32 1024, 1024
      %45 = vsyncadd [#allocation5], %s44
      %s46 = sshll.u32 [#allocation6], 4
      %s47 = int_to_ptr.vmem [resolvable:$true] %s46
      %52 = dma.hbm_to_vmem [thread:$0]  %s3, 1024, %s47, [#allocation5], 64, 64, 4
    $region17: #{tpu_custom_call.1} parent=1 // pred_fallthru
      _
    // Predicated region
    $region18: #{tpu_custom_call.1} parent=1 // pred_check
      _
    $region19: #{tpu_custom_call.1} parent=1 // pred_check_branch
      %54 = sbr.rel (0) target = $region21
    $region20: #{tpu_custom_call.1} parent=1 // pred_region
      _
    $region21: #{tpu_custom_call.1} parent=1 // pred_fallthru
      _
    // Predicated region
    $region22: #{tpu_custom_call.1} parent=1 // pred_check
      _
    $region23: #{tpu_custom_call.1} parent=1 // pred_check_branch
      %56 = sbr.rel (0) target = $region25
    $region24: #{tpu_custom_call.1} parent=1 // pred_region
      %s58 = ssub.s32 1024, 1024
      %59 = vsyncadd [#allocation8], %s58
      %s60 = sshll.u32 [#allocation7], 4
      %s61 = int_to_ptr.vmem [resolvable:$true] %s60
      %66 = dma.hbm_to_vmem [thread:$0]  %s5, 1024, %s61, [#allocation8], 64, 64, 4
    $region25: #{tpu_custom_call.1} parent=1 // pred_fallthru
      _
    // Predicated region
    $region26: #{tpu_custom_call.1} parent=1 // pred_check
      _
    $region27: #{tpu_custom_call.1} parent=1 // pred_check_branch
      %68 = sbr.rel (0) target = $region29
    $region28: #{tpu_custom_call.1} parent=1 // pred_region
      _
    $region29: #{tpu_custom_call.1} parent=1 // pred_fallthru
      _
    // Predicated region
    $region30: #{tpu_custom_call.1} parent=1 // pred_check
      _
    $region31: #{tpu_custom_call.1} parent=1 // pred_check_branch
      %70 = sbr.rel (0) target = $region33
    $region32: #{tpu_custom_call.1} parent=1 // pred_region
      %s72 = ssub.s32 1024, 1024
      %73 = vsyncadd [#allocation8], %s72
      %s74 = sshll.u32 [#allocation9], 4
      %s75 = int_to_ptr.vmem [resolvable:$true] %s74
      %80 = dma.hbm_to_vmem [thread:$0]  %s7, 1024, %s75, [#allocation8], 64, 64, 4
    $region33: #{tpu_custom_call.1} parent=1 // pred_fallthru
      _
    // Predicated region
    $region34: #{tpu_custom_call.1} parent=1 // pred_check
      _
    $region35: #{tpu_custom_call.1} parent=1 // pred_check_branch
      %82 = sbr.rel (0) target = $region37
    $region36: #{tpu_custom_call.1} parent=1 // pred_region
      _
    $region37: #{tpu_custom_call.1} parent=1 // pred_fallthru
      _
    // Predicated region
    $region38: #{tpu_custom_call.1} parent=1 // pred_check
      _
    $region39: #{tpu_custom_call.1} parent=1 // pred_check_branch
      %84 = sbr.rel (0) target = $region41
    $region40: #{tpu_custom_call.1} parent=1 // pred_region
      %85 = dma.done [#allocation3], 128
    $region41: #{tpu_custom_call.1} parent=1 // pred_fallthru
      _
    // Predicated region
    $region42: #{tpu_custom_call.1} parent=1 // pred_check
      _
    $region43: #{tpu_custom_call.1} parent=1 // pred_check_branch
      %87 = sbr.rel (0) target = $region45
    $region44: #{tpu_custom_call.1} parent=1 // pred_region
      %88 = dma.done [#allocation5], 128
    $region45: #{tpu_custom_call.1} parent=1 // pred_fallthru
      _
    // Predicated region
    $region46: #{tpu_custom_call.1} parent=1 // pred_check
      _
    $region47: #{tpu_custom_call.1} parent=1 // pred_check_branch
      %90 = sbr.rel (0) target = $region49
    $region48: #{tpu_custom_call.1} parent=1 // pred_region
      %91 = dma.done [#allocation5], 1024
    $region49: #{tpu_custom_call.1} parent=1 // pred_fallthru
      _
    // Predicated region
    $region50: #{tpu_custom_call.1} parent=1 // pred_check
      _
    $region51: #{tpu_custom_call.1} parent=1 // pred_check_branch
      %93 = sbr.rel (0) target = $region53
    $region52: #{tpu_custom_call.1} parent=1 // pred_region
      %94 = dma.done [#allocation8], 1024
    $region53: #{tpu_custom_call.1} parent=1 // pred_fallthru
      _
    // Predicated region
    $region54: #{tpu_custom_call.1} parent=1 // pred_check
      _
    $region55: #{tpu_custom_call.1} parent=1 // pred_check_branch
      %96 = sbr.rel (0) target = $region57
    $region56: #{tpu_custom_call.1} parent=1 // pred_region
      %97 = dma.done [#allocation8], 1024
    $region57: #{tpu_custom_call.1} parent=1 // pred_fallthru
      _
    %v99 = vld [vmem:[#allocation2] sm:$0xff]
    %v100 = vpack.c.bf16 %v99, %v99
    %v101 = vld [vmem:[#allocation4] sm:$0xf]
    %v102 = vld [vmem:[#allocation4 + $0x4] sm:$0xf]
    %v103 = vld [vmem:[%s2] sm:$0x1]
    %v105 = vlaneseq
    %v106 = vshrl.u32 %v105, 7
    %v107 = vsub.s32 0, %v106
    %v108 = vrot.slane %v103, %v107
    %v112 = vunpack.c.l.b16 %v101
    %v113 = vunpack.c.l.b16 %v102
    %v114 = vpack.c.b16 %v113, %v112
    %vm116 = vcmask 130048
    %v118 = vsel %vm116, %v100, 0
    %120 = vmatprep.subr.bf16.mxu0 0
    %121 = vmatpush1.bf16.msra.mxu0 %v114
    %122 = vmatprep.subr.bf16.mxu0 0
    %123 = vmatpush1.bf16.msra.mxu0 0
    %124 = vmatprep.subr.bf16.mxu0 0
    %125 = vmatpush1.bf16.msra.mxu0 0
    %126 = vmatprep.subr.bf16.mxu0 0
    %127 = vmatpush1.bf16.msra.mxu0 0
    %128 = vmatprep.subr.bf16.mxu0 0
    %129 = vmatpush1.bf16.msra.mxu0 0
    %130 = vmatprep.subr.bf16.mxu0 0
    %131 = vmatpush1.bf16.msra.mxu0 0
    %132 = vmatprep.subr.bf16.mxu0 0
    %133 = vmatpush1.bf16.msra.mxu0 0
    %134 = vmatprep.subr.bf16.mxu0 0
    %135 = vmatpush1.bf16.msra.mxu0 0
    %136 = vmatprep.subr.bf16.mxu0 0
    %137 = vmatpush1.bf16.msra.mxu0 0
    %138 = vmatprep.subr.bf16.mxu0 0
    %139 = vmatpush1.bf16.msra.mxu0 0
    %140 = vmatprep.subr.bf16.mxu0 0
    %141 = vmatpush1.bf16.msra.mxu0 0
    %142 = vmatprep.subr.bf16.mxu0 0
    %143 = vmatpush1.bf16.msra.mxu0 0
    %144 = vmatprep.subr.bf16.mxu0 0
    %145 = vmatpush1.bf16.msra.mxu0 0
    %146 = vmatprep.subr.bf16.mxu0 0
    %147 = vmatpush1.bf16.msra.mxu0 0
    %148 = vmatprep.subr.bf16.mxu0 0
    %149 = vmatpush1.bf16.msra.mxu0 0
    %150 = vmatprep.subr.bf16.mxu0 0
    %151 = vmatpush1.bf16.msra.mxu0 0
    %152 = vmatprep.mubr.bf16.mxu0 0
    %153 = vmatmul.mubr.bf16.gmra.mrb[0].mxu0 %v118
    %v154 = vpop.f32.mrb[0].mxu0
    %v155 = vadd.f32 %v108, %v154
    %v156 = vpop.f32.mrb[0].mxu0
    %v157 = vpop.f32.mrb[0].mxu0
    %v158 = vpop.f32.mrb[0].mxu0
    %159 = vdwg.mxu0
    %v160 = vmax.f32 %v155, 0.0
    %v161 = vpack.c.bf16 %v160, %v160
    %v162 = vld [vmem:[#allocation6] sm:$0xf]
    %v163 = vld [vmem:[#allocation6 + $0x4] sm:$0xf]
    %v164 = vld [vmem:[#allocation6 + $0x8] sm:$0xf]
    %v165 = vld [vmem:[#allocation6 + $0xc] sm:$0xf]
    %v166 = vld [vmem:[#allocation6 + $0x10] sm:$0xf]
    %v167 = vld [vmem:[#allocation6 + $0x14] sm:$0xf]
    %v168 = vld [vmem:[#allocation6 + $0x18] sm:$0xf]
    %v169 = vld [vmem:[#allocation6 + $0x1c] sm:$0xf]
    %v170 = vld [vmem:[#allocation6 + $0x20] sm:$0xf]
    %v171 = vld [vmem:[#allocation6 + $0x24] sm:$0xf]
    %v172 = vld [vmem:[#allocation6 + $0x28] sm:$0xf]
    %v173 = vld [vmem:[#allocation6 + $0x2c] sm:$0xf]
    %v174 = vld [vmem:[#allocation6 + $0x30] sm:$0xf]
    %v175 = vld [vmem:[#allocation6 + $0x34] sm:$0xf]
    %v176 = vld [vmem:[#allocation6 + $0x38] sm:$0xf]
    %v177 = vld [vmem:[#allocation6 + $0x3c] sm:$0xf]
    %v178 = vld [vmem:[%s4] sm:$0x1]
    %v180 = vlaneseq
    %v181 = vshrl.u32 %v180, 7
    %v182 = vsub.s32 0, %v181
    %v183 = vrot.slane %v178, %v182
    %v201 = vunpack.c.l.b16 %v162
    %v202 = vunpack.c.l.b16 %v163
    %v203 = vunpack.c.l.b16 %v164
    %v204 = vunpack.c.l.b16 %v165
    %v205 = vunpack.c.l.b16 %v166
    %v206 = vunpack.c.l.b16 %v167
    %v207 = vunpack.c.l.b16 %v168
    %v208 = vunpack.c.l.b16 %v169
    %v209 = vunpack.c.l.b16 %v170
    %v210 = vunpack.c.l.b16 %v171
    %v211 = vunpack.c.l.b16 %v172
    %v212 = vunpack.c.l.b16 %v173
    %v213 = vunpack.c.l.b16 %v174
    %v214 = vunpack.c.l.b16 %v175
    %v215 = vunpack.c.l.b16 %v176
    %v216 = vunpack.c.l.b16 %v177
    %v217 = vpack.c.b16 %v202, %v201
    %v218 = vpack.c.b16 %v204, %v203
    %v219 = vpack.c.b16 %v206, %v205
    %v220 = vpack.c.b16 %v208, %v207
    %v221 = vpack.c.b16 %v210, %v209
    %v222 = vpack.c.b16 %v212, %v211
    %v223 = vpack.c.b16 %v214, %v213
    %v224 = vpack.c.b16 %v216, %v215
    %233 = vmatprep.subr.bf16.mxu0 0
    %234 = vmatpush1.bf16.msra.mxu0 %v217
    %235 = vmatprep.subr.bf16.mxu0 0
    %236 = vmatpush1.bf16.msra.mxu0 %v218
    %237 = vmatprep.subr.bf16.mxu0 0
    %238 = vmatpush1.bf16.msra.mxu0 %v219
    %239 = vmatprep.subr.bf16.mxu0 0
    %240 = vmatpush1.bf16.msra.mxu0 %v220
    %241 = vmatprep.subr.bf16.mxu0 0
    %242 = vmatpush1.bf16.msra.mxu0 %v221
    %243 = vmatprep.subr.bf16.mxu0 0
    %244 = vmatpush1.bf16.msra.mxu0 %v222
    %245 = vmatprep.subr.bf16.mxu0 0
    %246 = vmatpush1.bf16.msra.mxu0 %v223
    %247 = vmatprep.subr.bf16.mxu0 0
    %248 = vmatpush1.bf16.msra.mxu0 %v224
    %249 = vmatprep.subr.bf16.mxu0 0
    %250 = vmatpush1.bf16.msra.mxu0 0
    %251 = vmatprep.subr.bf16.mxu0 0
    %252 = vmatpush1.bf16.msra.mxu0 0
    %253 = vmatprep.subr.bf16.mxu0 0
    %254 = vmatpush1.bf16.msra.mxu0 0
    %255 = vmatprep.subr.bf16.mxu0 0
    %256 = vmatpush1.bf16.msra.mxu0 0
    %257 = vmatprep.subr.bf16.mxu0 0
    %258 = vmatpush1.bf16.msra.mxu0 0
    %259 = vmatprep.subr.bf16.mxu0 0
    %260 = vmatpush1.bf16.msra.mxu0 0
    %261 = vmatprep.subr.bf16.mxu0 0
    %262 = vmatpush1.bf16.msra.mxu0 0
    %263 = vmatprep.subr.bf16.mxu0 0
    %264 = vmatpush1.bf16.msra.mxu0 0
    %265 = vmatprep.mubr.bf16.mxu0 0
    %266 = vmatmul.mubr.bf16.gmra.mrb[0].mxu0 %v161
    %v267 = vpop.f32.mrb[0].mxu0
    %v268 = vadd.f32 %v183, %v267
    %v269 = vpop.f32.mrb[0].mxu0
    %v270 = vpop.f32.mrb[0].mxu0
    %v271 = vpop.f32.mrb[0].mxu0
    %272 = vdwg.mxu0
    %v273 = vmax.f32 %v268, 0.0
    %v274 = vpack.c.bf16 %v273, %v273
    %v275 = vld [vmem:[#allocation7] sm:$0xf]
    %v276 = vld [vmem:[#allocation7 + $0x4] sm:$0xf]
    %v277 = vld [vmem:[#allocation7 + $0x8] sm:$0xf]
    %v278 = vld [vmem:[#allocation7 + $0xc] sm:$0xf]
    %v279 = vld [vmem:[#allocation7 + $0x10] sm:$0xf]
    %v280 = vld [vmem:[#allocation7 + $0x14] sm:$0xf]
    %v281 = vld [vmem:[#allocation7 + $0x18] sm:$0xf]
    %v282 = vld [vmem:[#allocation7 + $0x1c] sm:$0xf]
    %v283 = vld [vmem:[#allocation7 + $0x20] sm:$0xf]
    %v284 = vld [vmem:[#allocation7 + $0x24] sm:$0xf]
    %v285 = vld [vmem:[#allocation7 + $0x28] sm:$0xf]
    %v286 = vld [vmem:[#allocation7 + $0x2c] sm:$0xf]
    %v287 = vld [vmem:[#allocation7 + $0x30] sm:$0xf]
    %v288 = vld [vmem:[#allocation7 + $0x34] sm:$0xf]
    %v289 = vld [vmem:[#allocation7 + $0x38] sm:$0xf]
    %v290 = vld [vmem:[#allocation7 + $0x3c] sm:$0xf]
    %v291 = vld [vmem:[%s6] sm:$0x1]
    %v293 = vlaneseq
    %v294 = vshrl.u32 %v293, 7
    %v295 = vsub.s32 0, %v294
    %v296 = vrot.slane %v291, %v295
    %v314 = vunpack.c.l.b16 %v275
    %v315 = vunpack.c.l.b16 %v276
    %v316 = vunpack.c.l.b16 %v277
    %v317 = vunpack.c.l.b16 %v278
    %v318 = vunpack.c.l.b16 %v279
    %v319 = vunpack.c.l.b16 %v280
    %v320 = vunpack.c.l.b16 %v281
    %v321 = vunpack.c.l.b16 %v282
    %v322 = vunpack.c.l.b16 %v283
    %v323 = vunpack.c.l.b16 %v284
    %v324 = vunpack.c.l.b16 %v285
    %v325 = vunpack.c.l.b16 %v286
    %v326 = vunpack.c.l.b16 %v287
    %v327 = vunpack.c.l.b16 %v288
    %v328 = vunpack.c.l.b16 %v289
    %v329 = vunpack.c.l.b16 %v290
    %v330 = vpack.c.b16 %v315, %v314
    %v331 = vpack.c.b16 %v317, %v316
    %v332 = vpack.c.b16 %v319, %v318
    %v333 = vpack.c.b16 %v321, %v320
    %v334 = vpack.c.b16 %v323, %v322
    %v335 = vpack.c.b16 %v325, %v324
    %v336 = vpack.c.b16 %v327, %v326
    %v337 = vpack.c.b16 %v329, %v328
    %346 = vmatprep.subr.bf16.mxu0 0
    %347 = vmatpush1.bf16.msra.mxu0 %v330
    %348 = vmatprep.subr.bf16.mxu0 0
    %349 = vmatpush1.bf16.msra.mxu0 %v331
    %350 = vmatprep.subr.bf16.mxu0 0
    %351 = vmatpush1.bf16.msra.mxu0 %v332
    %352 = vmatprep.subr.bf16.mxu0 0
    %353 = vmatpush1.bf16.msra.mxu0 %v333
    %354 = vmatprep.subr.bf16.mxu0 0
    %355 = vmatpush1.bf16.msra.mxu0 %v334
    %356 = vmatprep.subr.bf16.mxu0 0
    %357 = vmatpush1.bf16.msra.mxu0 %v335
    %358 = vmatprep.subr.bf16.mxu0 0
    %359 = vmatpush1.bf16.msra.mxu0 %v336
    %360 = vmatprep.subr.bf16.mxu0 0
    %361 = vmatpush1.bf16.msra.mxu0 %v337
    %362 = vmatprep.subr.bf16.mxu0 0
    %363 = vmatpush1.bf16.msra.mxu0 0
    %364 = vmatprep.subr.bf16.mxu0 0
    %365 = vmatpush1.bf16.msra.mxu0 0
    %366 = vmatprep.subr.bf16.mxu0 0
    %367 = vmatpush1.bf16.msra.mxu0 0
    %368 = vmatprep.subr.bf16.mxu0 0
    %369 = vmatpush1.bf16.msra.mxu0 0
    %370 = vmatprep.subr.bf16.mxu0 0
    %371 = vmatpush1.bf16.msra.mxu0 0
    %372 = vmatprep.subr.bf16.mxu0 0
    %373 = vmatpush1.bf16.msra.mxu0 0
    %374 = vmatprep.subr.bf16.mxu0 0
    %375 = vmatpush1.bf16.msra.mxu0 0
    %376 = vmatprep.subr.bf16.mxu0 0
    %377 = vmatpush1.bf16.msra.mxu0 0
    %378 = vmatprep.mubr.bf16.mxu0 0
    %379 = vmatmul.mubr.bf16.gmra.mrb[0].mxu0 %v274
    %v380 = vpop.f32.mrb[0].mxu0
    %v381 = vadd.f32 %v296, %v380
    %v382 = vpop.f32.mrb[0].mxu0
    %v383 = vpop.f32.mrb[0].mxu0
    %v384 = vpop.f32.mrb[0].mxu0
    %385 = vdwg.mxu0
    %v386 = vmax.f32 %v381, 0.0
    %v387 = vpack.c.bf16 %v386, %v386
    %v388 = vld [vmem:[#allocation9] sm:$0xf]
    %v389 = vld [vmem:[#allocation9 + $0x4] sm:$0xf]
    %v390 = vld [vmem:[#allocation9 + $0x8] sm:$0xf]
    %v391 = vld [vmem:[#allocation9 + $0xc] sm:$0xf]
    %v392 = vld [vmem:[#allocation9 + $0x10] sm:$0xf]
    %v393 = vld [vmem:[#allocation9 + $0x14] sm:$0xf]
    %v394 = vld [vmem:[#allocation9 + $0x18] sm:$0xf]
    %v395 = vld [vmem:[#allocation9 + $0x1c] sm:$0xf]
    %v396 = vld [vmem:[#allocation9 + $0x20] sm:$0xf]
    %v397 = vld [vmem:[#allocation9 + $0x24] sm:$0xf]
    %v398 = vld [vmem:[#allocation9 + $0x28] sm:$0xf]
    %v399 = vld [vmem:[#allocation9 + $0x2c] sm:$0xf]
    %v400 = vld [vmem:[#allocation9 + $0x30] sm:$0xf]
    %v401 = vld [vmem:[#allocation9 + $0x34] sm:$0xf]
    %v402 = vld [vmem:[#allocation9 + $0x38] sm:$0xf]
    %v403 = vld [vmem:[#allocation9 + $0x3c] sm:$0xf]
    %v404 = vld [vmem:[%s8] sm:$0x1]
    %v406 = vlaneseq
    %v407 = vshrl.u32 %v406, 7
    %v408 = vsub.s32 0, %v407
    %v409 = vrot.slane %v404, %v408
    %v427 = vunpack.c.l.b16 %v388
    %v428 = vunpack.c.l.b16 %v389
    %v429 = vunpack.c.l.b16 %v390
    %v430 = vunpack.c.l.b16 %v391
    %v431 = vunpack.c.l.b16 %v392
    %v432 = vunpack.c.l.b16 %v393
    %v433 = vunpack.c.l.b16 %v394
    %v434 = vunpack.c.l.b16 %v395
    %v435 = vunpack.c.l.b16 %v396
    %v436 = vunpack.c.l.b16 %v397
    %v437 = vunpack.c.l.b16 %v398
    %v438 = vunpack.c.l.b16 %v399
    %v439 = vunpack.c.l.b16 %v400
    %v440 = vunpack.c.l.b16 %v401
    %v441 = vunpack.c.l.b16 %v402
    %v442 = vunpack.c.l.b16 %v403
    %v443 = vpack.c.b16 %v428, %v427
    %v444 = vpack.c.b16 %v430, %v429
    %v445 = vpack.c.b16 %v432, %v431
    %v446 = vpack.c.b16 %v434, %v433
    %v447 = vpack.c.b16 %v436, %v435
    %v448 = vpack.c.b16 %v438, %v437
    %v449 = vpack.c.b16 %v440, %v439
    %v450 = vpack.c.b16 %v442, %v441
    %459 = vmatprep.subr.bf16.mxu0 0
    %460 = vmatpush1.bf16.msra.mxu0 %v443
    %461 = vmatprep.subr.bf16.mxu0 0
    %462 = vmatpush1.bf16.msra.mxu0 %v444
    %463 = vmatprep.subr.bf16.mxu0 0
    %464 = vmatpush1.bf16.msra.mxu0 %v445
    %465 = vmatprep.subr.bf16.mxu0 0
    %466 = vmatpush1.bf16.msra.mxu0 %v446
    %467 = vmatprep.subr.bf16.mxu0 0
    %468 = vmatpush1.bf16.msra.mxu0 %v447
    %469 = vmatprep.subr.bf16.mxu0 0
    %470 = vmatpush1.bf16.msra.mxu0 %v448
    %471 = vmatprep.subr.bf16.mxu0 0
    %472 = vmatpush1.bf16.msra.mxu0 %v449
    %473 = vmatprep.subr.bf16.mxu0 0
    %474 = vmatpush1.bf16.msra.mxu0 %v450
    %475 = vmatprep.subr.bf16.mxu0 0
    %476 = vmatpush1.bf16.msra.mxu0 0
    %477 = vmatprep.subr.bf16.mxu0 0
    %478 = vmatpush1.bf16.msra.mxu0 0
    %479 = vmatprep.subr.bf16.mxu0 0
    %480 = vmatpush1.bf16.msra.mxu0 0
    %481 = vmatprep.subr.bf16.mxu0 0
    %482 = vmatpush1.bf16.msra.mxu0 0
    %483 = vmatprep.subr.bf16.mxu0 0
    %484 = vmatpush1.bf16.msra.mxu0 0
    %485 = vmatprep.subr.bf16.mxu0 0
    %486 = vmatpush1.bf16.msra.mxu0 0
    %487 = vmatprep.subr.bf16.mxu0 0
    %488 = vmatpush1.bf16.msra.mxu0 0
    %489 = vmatprep.subr.bf16.mxu0 0
    %490 = vmatpush1.bf16.msra.mxu0 0
    %491 = vmatprep.mubr.bf16.mxu0 0
    %492 = vmatmul.mubr.bf16.gmra.mrb[0].mxu0 %v387
    %v493 = vpop.f32.mrb[0].mxu0
    %v494 = vadd.f32 %v409, %v493
    %v495 = vpop.f32.mrb[0].mxu0
    %v496 = vpop.f32.mrb[0].mxu0
    %v497 = vpop.f32.mrb[0].mxu0
    %498 = vdwg.mxu0
    %vm499 = vcmask 31744
    %500 = vst.msk [vmem:[%s9] sm:$0xff] %vm499, %v494
    // Predicated region
    $region58: #{tpu_custom_call.1} parent=1 // pred_check
      _
    $region59: #{tpu_custom_call.1} parent=1 // pred_check_branch
      %502 = sbr.rel (0) target = $region61
    $region60: #{tpu_custom_call.1} parent=1 // pred_region
      _
    $region61: #{tpu_custom_call.1} parent=1 // pred_fallthru
      _
    // Predicated region
    $region62: #{tpu_custom_call.1} parent=1 // pred_check
      _
    $region63: #{tpu_custom_call.1} parent=1 // pred_check_branch
      %504 = sbr.rel (0) target = $region65
    $region64: #{tpu_custom_call.1} parent=1 // pred_region
      _
    $region65: #{tpu_custom_call.1} parent=1 // pred_fallthru
      _
    %505 = vsyncpa [#allocation3], 1
    %506 = vsyncpa [#allocation5], 1
    %507 = vsyncpa [#allocation8], 1

</llo_original>
